<compile_context>
chip_gen: v6e
topology: v6e:2x2x1
jax: 0.10.0
libtpu: 0.0.40
codegen_flags: <defaults>
</compile_context>

<pallas_src>
import jax
import jax.numpy as jnp
from jax.experimental import pallas as pl
from jax.experimental.pallas import tpu as pltpu


# ---------------------------------------------------------------------------
# Pallas kernel: Bn sequences per grid step
# ---------------------------------------------------------------------------
def sap_kernel(x_ref, v_ref, c_ref, out_ref):
    # x_ref: (Bn, T, H) streamed in the caller's dtype; up-cast per tile in VMEM.
    x = x_ref[...].astype(jnp.float32)                     # (Bn, T, H)
    v = v_ref[...][None, :, :]                             # (1, 1, H)  f32
    c = c_ref[0]                                           # scalar f32 (SMEM)

    # attention logits: tanh(<x_t, v> + c)  -> (Bn, T)
    # VPU multiply + XLU lane reduce + EUP tanh (no MXU work left after folding).
    score = jnp.tanh(jnp.sum(x * v, axis=-1) + c)          # (Bn, T)

    # attn dropout (p=0.7) is identity in eval mode.

    # numerically-stable softmax over T, kept UNNORMALISED; normalise once at the end.
    m = jnp.max(score, axis=-1, keepdims=True)             # (Bn, 1)
    p = jnp.exp(score - m)                                  # (Bn, T)
    l = jnp.sum(p, axis=-1, keepdims=True)                  # (Bn, 1), always >= 1

    # attention-weighted sum over T, then a single scale by 1/l (EUP reciprocal).
    acc = jnp.sum(x * p[:, :, None], axis=1)                # (Bn, H) f32
    out_ref[...] = (acc * pl.reciprocal(l, approx=True)).astype(out_ref.dtype)


# ---------------------------------------------------------------------------
# batch-tile heuristic
# ---------------------------------------------------------------------------
def _pick_block_n(N, T, H, itemsize):
    """Multiple of 8 (sublane-dense output stores), double-buffered x tile kept
    under ~6 MiB (safe on v7x's smaller VMEM and v5e's 16 MiB default scoped
    limit), and >=2 grid steps when the batch is big enough (v7x has 2 TCs)."""
    n_pad8 = -(-N // 8) * 8
    budget = 6 << 20                       # bytes for the double-buffered x tile
    bn = 8
    while bn < 128:
        nxt = bn * 2
        if nxt >= n_pad8:
            break
        if 2 * nxt * T * H * itemsize > budget:
            break
        if N >= 16 and -(-n_pad8 // nxt) < 2:
            break
        bn = nxt
    return min(bn, n_pad8)


# ---------------------------------------------------------------------------
# wrapper
# ---------------------------------------------------------------------------
def self_attentive_pooling(inputs, W_weight, W_bias, u, *, block_n=None):
    """inputs: (N, T, H); W_weight: (E, H); W_bias: (E,); u: (E,) -> (N, H)."""
    N, T, H = inputs.shape
    f32 = jnp.float32

    # Fold the u-projection into the Linear (valid because tanh follows the
    # bmm in this module):  score = tanh((x W^T + b) . u) = tanh(x . (W^T u) + b.u)
    v = jnp.einsum("eh,e->h", W_weight.astype(f32), u.astype(f32))      # (H,)
    c = jnp.dot(W_bias.astype(f32), u.astype(f32)).reshape(1)           # (1,)
    v2 = v.reshape(1, H)

    if block_n is None:
        block_n = _pick_block_n(N, T, H, inputs.dtype.itemsize)
    n_pad = -(-N // block_n) * block_n

    x = inputs                                   # stream in native dtype (bf16 OK)
    if n_pad != N:
        x = jnp.pad(x, ((0, n_pad - N), (0, 0), (0, 0)))   # zero rows -> zero outputs

    out = pl.pallas_call(
        sap_kernel,
        out_shape=jax.ShapeDtypeStruct((n_pad, H), inputs.dtype),
        grid=(n_pad // block_n,),
        in_specs=[
            pl.BlockSpec((block_n, T, H), lambda i: (i, 0, 0)),      # x tile
            pl.BlockSpec((1, H), lambda i: (0, 0)),                  # folded v (resident)
            pl.BlockSpec(memory_space=pltpu.MemorySpace.SMEM),       # scalar c
        ],
        out_specs=pl.BlockSpec((block_n, H), lambda i: (i, 0)),
        compiler_params=pltpu.CompilerParams(
            dimension_semantics=("parallel",)),
    )(x, v2, c)
    return out[:N]


# ---------------------------------------------------------------------------
# pure-JAX reference (eval-mode forward of the PyTorch module)
# ---------------------------------------------------------------------------
def sap_reference(inputs, W_weight, W_bias, u):
    lin = jnp.einsum("nth,eh->nte", inputs, W_weight) + W_bias     # (N, T, E)
    score = jnp.tanh(jnp.einsum("nte,e->nt", lin, u))              # (N, T)
    attn = jax.nn.softmax(score, axis=1)                           # (N, T)
    return jnp.einsum("nt,nth->nh", attn, inputs)                  # (N, H)


# ---------------------------------------------------------------------------
if __name__ == "__main__":
    N, T, H, E = 2, 16, 32, 16          # batch, seq len, input_dim, embed_dim

    key = jax.random.PRNGKey(0)
    k_x, k_w, k_b, k_u = jax.random.split(key, 4)
    inputs = jax.random.normal(k_x, (N, T, H), dtype=jnp.float32)
    W_weight = jax.random.normal(k_w, (E, H), dtype=jnp.float32) * 0.1
    W_bias = jax.random.normal(k_b, (E,), dtype=jnp.float32) * 0.1
    u = jax.random.normal(k_u, (E,), dtype=jnp.float32)

    ref = sap_reference(inputs, W_weight, W_bias, u)

    # f32 input path (only nonexact step is the approx EUP reciprocal -> loose tol)
    out = self_attentive_pooling(inputs, W_weight, W_bias, u)
    out = jax.block_until_ready(out)
    assert out.shape == (N, H)
    assert jnp.allclose(out, ref, rtol=2e-2, atol=2e-2), "mismatch vs reference (f32)"

    # bf16 streaming path (halves HBM traffic; math still accumulated in f32)
    out_bf16 = self_attentive_pooling(inputs.astype(jnp.bfloat16), W_weight, W_bias, u)
    out_bf16 = jax.block_until_ready(out_bf16)
    assert out_bf16.shape == (N, H)
    assert jnp.allclose(out_bf16.astype(jnp.float32), ref, rtol=5e-2, atol=5e-2), \
        "mismatch vs reference (bf16)"

    print("KERNEL_OK")
</pallas_src>

<mosaic_0001>
module attributes {stable_mosaic.version = 11 : i64} {
  func.func @sap_kernel(%arg0: i32, %arg1: memref<8x16x32xf32, #tpu.memory_space<vmem>>, %arg2: memref<1x32xf32, #tpu.memory_space<vmem>>, %arg3: memref<1xf32, #tpu.memory_space<smem>>, %arg4: memref<8x32xf32, #tpu.memory_space<vmem>>) attributes {dimension_semantics = [#tpu.dimension_semantics<parallel>], iteration_bounds = array<i64: 1>, scalar_prefetch = 0 : i64, scratch_operands = 0 : i64, tpu.core_type = #tpu.core_type<tc>, window_params = [{transform_indices = @transform_0, window_bounds = array<i64: 8, 16, 32>}, {pipeline_mode = #tpu.pipeline_mode<synchronous>, transform_indices = @transform_1, window_bounds = array<i64: 1, 32>}, {transform_indices = @transform_2, window_bounds = array<i64: 1>}, {transform_indices = @transform_3, window_bounds = array<i64: 8, 32>}]} {
    %c0 = arith.constant 0 : index
    %c0_0 = arith.constant 0 : index
    %c0_1 = arith.constant 0 : index
    %0 = vector.load %arg1[%c0, %c0_0, %c0_1] : memref<8x16x32xf32, #tpu.memory_space<vmem>>, vector<8x16x32xf32>
    %c0_2 = arith.constant 0 : index
    %c0_3 = arith.constant 0 : index
    %1 = vector.load %arg2[%c0_2, %c0_3] : memref<1x32xf32, #tpu.memory_space<vmem>>, vector<1x32xf32>
    %2 = vector.shape_cast %1 : vector<1x32xf32> to vector<1x1x32xf32>
    %c0_4 = arith.constant 0 : index
    %3 = memref.load %arg3[%c0_4] : memref<1xf32, #tpu.memory_space<smem>>
    %4 = vector.broadcast %2 : vector<1x1x32xf32> to vector<8x16x32xf32>
    %5 = arith.mulf %0, %4 : vector<8x16x32xf32>
    %cst = arith.constant dense<0.000000e+00> : vector<8x16xf32>
    %6 = vector.multi_reduction <add>, %5, %cst [2] : vector<8x16x32xf32> to vector<8x16xf32>
    %7 = vector.broadcast %3 : f32 to vector<8x16xf32>
    %8 = arith.addf %6, %7 : vector<8x16xf32>
    %9 = math.tanh %8 : vector<8x16xf32>
    %cst_5 = arith.constant dense<0xFF800000> : vector<8xf32>
    %10 = vector.multi_reduction <maximumf>, %9, %cst_5 [1] : vector<8x16xf32> to vector<8xf32>
    %11 = vector.shape_cast %10 : vector<8xf32> to vector<8x1xf32>
    %12 = vector.broadcast %11 : vector<8x1xf32> to vector<8x16xf32>
    %13 = arith.subf %9, %12 : vector<8x16xf32>
    %14 = math.exp %13 : vector<8x16xf32>
    %cst_6 = arith.constant dense<0.000000e+00> : vector<8xf32>
    %15 = vector.multi_reduction <add>, %14, %cst_6 [1] : vector<8x16xf32> to vector<8xf32>
    %16 = vector.shape_cast %15 : vector<8xf32> to vector<8x1xf32>
    %17 = vector.shape_cast %14 : vector<8x16xf32> to vector<8x16x1xf32>
    %18 = vector.broadcast %17 : vector<8x16x1xf32> to vector<8x16x32xf32>
    %19 = arith.mulf %0, %18 : vector<8x16x32xf32>
    %cst_7 = arith.constant dense<0.000000e+00> : vector<8x32xf32>
    %20 = vector.multi_reduction <add>, %19, %cst_7 [1] : vector<8x16x32xf32> to vector<8x32xf32>
    %21 = tpu.reciprocal %16 {approx = true} : vector<8x1xf32> -> vector<8x1xf32>
    %22 = vector.broadcast %21 : vector<8x1xf32> to vector<8x32xf32>
    %23 = arith.mulf %20, %22 : vector<8x32xf32>
    %c0_8 = arith.constant 0 : index
    %c0_9 = arith.constant 0 : index
    %24 = vector.load %arg4[%c0_8, %c0_9] : memref<8x32xf32, #tpu.memory_space<vmem>>, vector<8x32xf32>
    tpu.vector_store %arg4[%c0_8, %c0_9], %23 {strides = array<i32>} : memref<8x32xf32, #tpu.memory_space<vmem>>, vector<8x32xf32>,
    return
  }
  func.func @transform_0(%arg0: i32) -> (i32, i32, i32) {
    %c0_i32 = arith.constant 0 : i32
    %c0_i32_0 = arith.constant 0 : i32
    %c0_i32_1 = arith.constant 0 : i32
    return %arg0, %c0_i32, %c0_i32_0 : i32, i32, i32
  }
  func.func @transform_1(%arg0: i32) -> (i32, i32) {
    %c0_i32 = arith.constant 0 : i32
    %c0_i32_0 = arith.constant 0 : i32
    %c0_i32_1 = arith.constant 0 : i32
    return %c0_i32, %c0_i32_0 : i32, i32
  }
  func.func @transform_2(%arg0: i32) -> i32 {
    %c0_i32 = arith.constant 0 : i32
    %c0_i32_0 = arith.constant 0 : i32
    return %c0_i32 : i32
  }
  func.func @transform_3(%arg0: i32) -> (i32, i32) {
    %c0_i32 = arith.constant 0 : i32
    %c0_i32_0 = arith.constant 0 : i32
    return %arg0, %c0_i32 : i32, i32
  }
}

</mosaic_0001>

<llo_original>
// kernel: tpu_custom_call.1
$region0: #{tpu_custom_call.1}
  #allocation0 [shape = 'u32[]', space=smem, size = 0x4, offset = 0x4, fixed_abs, tag = 'smem constant byte address 0x4 - core index']
  #allocation1 [shape = 'u32[144,128]{1,0:T(1,128)}', space=vmem, size = 0x12000, scoped, tag = 'internal scratch']
  #allocation2 [shape = 'f32[1]{0:T(128)S(6)}', space=smem, size = 0x200, scoped, tag = 'scoped memory for tpu_custom_call.1']
  %s0 = inlined_call_operand.hbm [shape: f32[8,16,32], index: 0, kind: input, shape index: {}]
  %s1 = inlined_call_operand.vmem [shape: f32[1,32], index: 1, kind: input, shape index: {}]
  %s2 = inlined_call_operand.<no memory space> [shape: f32[1], index: 2, kind: input, shape index: {}]
  %s3 = inlined_call_operand.hbm [shape: f32[8,32], index: 3, kind: output, shape index: {}]
  %s4 = sld [smem:[#allocation0]]
  $region26: #{tpu_custom_call.1} parent=0
    _
  %s6 = ssub.s32 1, %s4
  %s7 = scalar_select 0, %s6, %s4
  %8 = sst [smem:[#allocation2]] %s2
  $region1: #{tpu_custom_call.1} parent=0
    #allocation3 [shape = 'u8[65536]{0}', space=vmem, size = 0x10000, scoped, tag = 'input window, operand 0, single buffered']
    #allocation4 [shape = 's32[1]{0}', space=sflag, size = 0x4, scoped, tag = 'scoped memory for tpu_custom_call.1']
    #allocation5 [shape = 's32[1]{0}', space=sflag, size = 0x4, scoped, tag = 'scoped memory for tpu_custom_call.1']
    #allocation6 [shape = 'u8[4096]{0}', space=vmem, size = 0x1000, scoped, tag = 'output window, operand 0, single buffered']
    %9 = vsyncpa [#allocation4], 0
    %10 = vsyncpa [#allocation5], 0
    // Predicated region
    $region2: #{tpu_custom_call.1} parent=1 // pred_check
      _
    $region3: #{tpu_custom_call.1} parent=1 // pred_check_branch
      %12 = sbr.rel (0) target = $region5
    $region4: #{tpu_custom_call.1} parent=1 // pred_region
      %s14 = ssub.s32 2048, 2048
      %15 = vsyncadd [#allocation4], %s14
      %s16 = sshll.u32 [#allocation3], 4
      %s17 = int_to_ptr.vmem [resolvable:$true] %s16
      %22 = dma.hbm_to_vmem [thread:$0]  %s0, 2048, %s17, [#allocation4], 128, 128, 8
    $region5: #{tpu_custom_call.1} parent=1 // pred_fallthru
      _
    // Predicated region
    $region6: #{tpu_custom_call.1} parent=1 // pred_check
      _
    $region7: #{tpu_custom_call.1} parent=1 // pred_check_branch
      %24 = sbr.rel (0) target = $region9
    $region8: #{tpu_custom_call.1} parent=1 // pred_region
      _
    $region9: #{tpu_custom_call.1} parent=1 // pred_fallthru
      _
    // Predicated region
    $region10: #{tpu_custom_call.1} parent=1 // pred_check
      _
    $region11: #{tpu_custom_call.1} parent=1 // pred_check_branch
      %26 = sbr.rel (0) target = $region13
    $region12: #{tpu_custom_call.1} parent=1 // pred_region
      _
    $region13: #{tpu_custom_call.1} parent=1 // pred_fallthru
      _
    // Predicated region
    $region14: #{tpu_custom_call.1} parent=1 // pred_check
      _
    $region15: #{tpu_custom_call.1} parent=1 // pred_check_branch
      %28 = sbr.rel (0) target = $region17
    $region16: #{tpu_custom_call.1} parent=1 // pred_region
      %29 = dma.done [#allocation4], 2048
    $region17: #{tpu_custom_call.1} parent=1 // pred_fallthru
      _
    %v30 = vld [vmem:[#allocation3] sm:$0xff]
    %v31 = vld [vmem:[#allocation3 + $0x8] sm:$0xff]
    %v32 = vld [vmem:[#allocation3 + $0x10] sm:$0xff]
    %v33 = vld [vmem:[#allocation3 + $0x18] sm:$0xff]
    %v34 = vld [vmem:[#allocation3 + $0x20] sm:$0xff]
    %v35 = vld [vmem:[#allocation3 + $0x28] sm:$0xff]
    %v36 = vld [vmem:[#allocation3 + $0x30] sm:$0xff]
    %v37 = vld [vmem:[#allocation3 + $0x38] sm:$0xff]
    %v38 = vld [vmem:[#allocation3 + $0x40] sm:$0xff]
    %v39 = vld [vmem:[#allocation3 + $0x48] sm:$0xff]
    %v40 = vld [vmem:[#allocation3 + $0x50] sm:$0xff]
    %v41 = vld [vmem:[#allocation3 + $0x58] sm:$0xff]
    %v42 = vld [vmem:[#allocation3 + $0x60] sm:$0xff]
    %v43 = vld [vmem:[#allocation3 + $0x68] sm:$0xff]
    %v44 = vld [vmem:[#allocation3 + $0x70] sm:$0xff]
    %v45 = vld [vmem:[#allocation3 + $0x78] sm:$0xff]
    %v46 = vld [vmem:[%s1] sm:$0x1]
    %s47 = sld [smem:[#allocation2]]
    %v49 = vlaneseq
    %v50 = vshrl.u32 %v49, 7
    %v51 = vsub.s32 0, %v50
    %v52 = vrot.slane %v46, %v51
    %v54 = vmul.f32 %v30, %v52
    %v55 = vmul.f32 %v31, %v52
    %v56 = vmul.f32 %v32, %v52
    %v57 = vmul.f32 %v33, %v52
    %v58 = vmul.f32 %v34, %v52
    %v59 = vmul.f32 %v35, %v52
    %v60 = vmul.f32 %v36, %v52
    %v61 = vmul.f32 %v37, %v52
    %v62 = vmul.f32 %v38, %v52
    %v63 = vmul.f32 %v39, %v52
    %v64 = vmul.f32 %v40, %v52
    %v65 = vmul.f32 %v41, %v52
    %v66 = vmul.f32 %v42, %v52
    %v67 = vmul.f32 %v43, %v52
    %v68 = vmul.f32 %v44, %v52
    %v69 = vmul.f32 %v45, %v52
    %vm70 = vcmask 261120
    %v71 = vsel %vm70, %v54, 0.0
    %72 = vadd.xlane.f32.xlu0 %v71
    %v73 = vpop.xlane.xlu0 %72
    %v74 = vsel %vm70, %v55, 0.0
    %75 = vadd.xlane.f32.xlu0 %v74
    %v76 = vpop.xlane.xlu0 %75
    %v77 = vsel %vm70, %v56, 0.0
    %78 = vadd.xlane.f32.xlu0 %v77
    %v79 = vpop.xlane.xlu0 %78
    %v80 = vsel %vm70, %v57, 0.0
    %81 = vadd.xlane.f32.xlu0 %v80
    %v82 = vpop.xlane.xlu0 %81
    %v83 = vsel %vm70, %v58, 0.0
    %84 = vadd.xlane.f32.xlu0 %v83
    %v85 = vpop.xlane.xlu0 %84
    %v86 = vsel %vm70, %v59, 0.0
    %87 = vadd.xlane.f32.xlu0 %v86
    %v88 = vpop.xlane.xlu0 %87
    %v89 = vsel %vm70, %v60, 0.0
    %90 = vadd.xlane.f32.xlu0 %v89
    %v91 = vpop.xlane.xlu0 %90
    %v92 = vsel %vm70, %v61, 0.0
    %93 = vadd.xlane.f32.xlu0 %v92
    %v94 = vpop.xlane.xlu0 %93
    %v95 = vsel %vm70, %v62, 0.0
    %96 = vadd.xlane.f32.xlu0 %v95
    %v97 = vpop.xlane.xlu0 %96
    %v98 = vsel %vm70, %v63, 0.0
    %99 = vadd.xlane.f32.xlu0 %v98
    %v100 = vpop.xlane.xlu0 %99
    %v101 = vsel %vm70, %v64, 0.0
    %102 = vadd.xlane.f32.xlu0 %v101
    %v103 = vpop.xlane.xlu0 %102
    %v104 = vsel %vm70, %v65, 0.0
    %105 = vadd.xlane.f32.xlu0 %v104
    %v106 = vpop.xlane.xlu0 %105
    %v107 = vsel %vm70, %v66, 0.0
    %108 = vadd.xlane.f32.xlu0 %v107
    %v109 = vpop.xlane.xlu0 %108
    %v110 = vsel %vm70, %v67, 0.0
    %111 = vadd.xlane.f32.xlu0 %v110
    %v112 = vpop.xlane.xlu0 %111
    %v113 = vsel %vm70, %v68, 0.0
    %114 = vadd.xlane.f32.xlu0 %v113
    %v115 = vpop.xlane.xlu0 %114
    %v116 = vsel %vm70, %v69, 0.0
    %117 = vadd.xlane.f32.xlu0 %v116
    %v118 = vpop.xlane.xlu0 %117
    %v119 = vstv %s47
    %v120 = vadd.f32 %v73, %v119
    %v121 = vadd.f32 %v76, %v119
    %v122 = vadd.f32 %v79, %v119
    %v123 = vadd.f32 %v82, %v119
    %v124 = vadd.f32 %v85, %v119
    %v125 = vadd.f32 %v88, %v119
    %v126 = vadd.f32 %v91, %v119
    %v127 = vadd.f32 %v94, %v119
    %v128 = vadd.f32 %v97, %v119
    %v129 = vadd.f32 %v100, %v119
    %v130 = vadd.f32 %v103, %v119
    %v131 = vadd.f32 %v106, %v119
    %v132 = vadd.f32 %v109, %v119
    %v133 = vadd.f32 %v112, %v119
    %v134 = vadd.f32 %v115, %v119
    %v135 = vadd.f32 %v118, %v119
    %v136 = vtanh.pop %v120
    %v137 = vtanh.pop %v121
    %v138 = vtanh.pop %v122
    %v139 = vtanh.pop %v123
    %v140 = vtanh.pop %v124
    %v141 = vtanh.pop %v125
    %v142 = vtanh.pop %v126
    %v143 = vtanh.pop %v127
    %v144 = vtanh.pop %v128
    %v145 = vtanh.pop %v129
    %v146 = vtanh.pop %v130
    %v147 = vtanh.pop %v131
    %v148 = vtanh.pop %v132
    %v149 = vtanh.pop %v133
    %v150 = vtanh.pop %v134
    %v151 = vtanh.pop %v135
    %v168 = vlaneseq
    %v169 = vand.u32 %v168, 127
    %v170 = vlaneseq
    %v171 = vshrl.u32 %v170, 7
    %v172 = vsub.s32 %v169, %v171
    %v173 = vrot.slane %v136, %v172
    %v174 = vadd.s32 %v169, 4294967288
    %v175 = vlaneseq
    %v176 = vshrl.u32 %v175, 7
    %v177 = vsub.s32 %v174, %v176
    %v178 = vrot.slane %v137, %v177
    %vm179 = vcmask 130112
    %v180 = vsel %vm179, %v178, %v173
    %v181 = vlaneseq
    %v182 = vshrl.u32 %v181, 7
    %v183 = vsub.s32 %v169, %v182
    %v184 = vrot.slane %v138, %v183
    %v185 = vlaneseq
    %v186 = vshrl.u32 %v185, 7
    %v187 = vsub.s32 %v174, %v186
    %v188 = vrot.slane %v139, %v187
    %v189 = vsel %vm179, %v188, %v184
    %v190 = vlaneseq
    %v191 = vshrl.u32 %v190, 7
    %v192 = vsub.s32 %v169, %v191
    %v193 = vrot.slane %v140, %v192
    %v194 = vlaneseq
    %v195 = vshrl.u32 %v194, 7
    %v196 = vsub.s32 %v174, %v195
    %v197 = vrot.slane %v141, %v196
    %v198 = vsel %vm179, %v197, %v193
    %v199 = vlaneseq
    %v200 = vshrl.u32 %v199, 7
    %v201 = vsub.s32 %v169, %v200
    %v202 = vrot.slane %v142, %v201
    %v203 = vlaneseq
    %v204 = vshrl.u32 %v203, 7
    %v205 = vsub.s32 %v174, %v204
    %v206 = vrot.slane %v143, %v205
    %v207 = vsel %vm179, %v206, %v202
    %v208 = vlaneseq
    %v209 = vshrl.u32 %v208, 7
    %v210 = vsub.s32 %v169, %v209
    %v211 = vrot.slane %v144, %v210
    %v212 = vlaneseq
    %v213 = vshrl.u32 %v212, 7
    %v214 = vsub.s32 %v174, %v213
    %v215 = vrot.slane %v145, %v214
    %v216 = vsel %vm179, %v215, %v211
    %v217 = vlaneseq
    %v218 = vshrl.u32 %v217, 7
    %v219 = vsub.s32 %v169, %v218
    %v220 = vrot.slane %v146, %v219
    %v221 = vlaneseq
    %v222 = vshrl.u32 %v221, 7
    %v223 = vsub.s32 %v174, %v222
    %v224 = vrot.slane %v147, %v223
    %v225 = vsel %vm179, %v224, %v220
    %v226 = vlaneseq
    %v227 = vshrl.u32 %v226, 7
    %v228 = vsub.s32 %v169, %v227
    %v229 = vrot.slane %v148, %v228
    %v230 = vlaneseq
    %v231 = vshrl.u32 %v230, 7
    %v232 = vsub.s32 %v174, %v231
    %v233 = vrot.slane %v149, %v232
    %v234 = vsel %vm179, %v233, %v229
    %v235 = vlaneseq
    %v236 = vshrl.u32 %v235, 7
    %v237 = vsub.s32 %v169, %v236
    %v238 = vrot.slane %v150, %v237
    %v239 = vlaneseq
    %v240 = vshrl.u32 %v239, 7
    %v241 = vsub.s32 %v174, %v240
    %v242 = vrot.slane %v151, %v241
    %v243 = vsel %vm179, %v242, %v238
    %vm244 = vcmask 1041409
    %v245 = vsel %vm244, %v189, %v180
    %vm246 = vcmask 1042434
    %v247 = vsel %vm246, %v198, %v245
    %vm248 = vcmask 1043459
    %v249 = vsel %vm248, %v207, %v247
    %vm250 = vcmask 1044484
    %v251 = vsel %vm250, %v216, %v249
    %vm252 = vcmask 1045509
    %v253 = vsel %vm252, %v225, %v251
    %vm254 = vcmask 1046534
    %v255 = vsel %vm254, %v234, %v253
    %vm256 = vcmask 1047559
    %v257 = vsel %vm256, %v243, %v255
    %vm259 = vcmask 130048
    %v260 = vsel %vm259, %v257, -inf
    %261 = vmax.xlane.f32.xlu0 %v260
    %v262 = vpop.xlane.xlu0 %261
    %v264 = vlaneseq
    %v265 = vshrl.u32 %v264, 7
    %v266 = vsub.s32 0, %v265
    %v267 = vrot.slane %v262, %v266
    %v268 = vlaneseq
    %v269 = vshrl.u32 %v268, 7
    %v270 = vsub.s32 1, %v269
    %v271 = vrot.slane %v262, %v270
    %v272 = vlaneseq
    %v273 = vshrl.u32 %v272, 7
    %v274 = vsub.s32 2, %v273
    %v275 = vrot.slane %v262, %v274
    %v276 = vlaneseq
    %v277 = vshrl.u32 %v276, 7
    %v278 = vsub.s32 3, %v277
    %v279 = vrot.slane %v262, %v278
    %v280 = vlaneseq
    %v281 = vshrl.u32 %v280, 7
    %v282 = vsub.s32 4, %v281
    %v283 = vrot.slane %v262, %v282
    %v284 = vlaneseq
    %v285 = vshrl.u32 %v284, 7
    %v286 = vsub.s32 5, %v285
    %v287 = vrot.slane %v262, %v286
    %v288 = vlaneseq
    %v289 = vshrl.u32 %v288, 7
    %v290 = vsub.s32 6, %v289
    %v291 = vrot.slane %v262, %v290
    %v292 = vlaneseq
    %v293 = vshrl.u32 %v292, 7
    %v294 = vsub.s32 7, %v293
    %v295 = vrot.slane %v262, %v294
    %v304 = vsub.f32 %v136, %v267
    %v305 = vsub.f32 %v137, %v267
    %v306 = vsub.f32 %v138, %v271
    %v307 = vsub.f32 %v139, %v271
    %v308 = vsub.f32 %v140, %v275
    %v309 = vsub.f32 %v141, %v275
    %v310 = vsub.f32 %v142, %v279
    %v311 = vsub.f32 %v143, %v279
    %v312 = vsub.f32 %v144, %v283
    %v313 = vsub.f32 %v145, %v283
    %v314 = vsub.f32 %v146, %v287
    %v315 = vsub.f32 %v147, %v287
    %v316 = vsub.f32 %v148, %v291
    %v317 = vsub.f32 %v149, %v291
    %v318 = vsub.f32 %v150, %v295
    %v319 = vsub.f32 %v151, %v295
    %v320 = vmul.f32 %v304, 1.442695
    %v321 = vpow.pop %v320
    %v322 = vmul.f32 %v305, 1.442695
    %v323 = vpow.pop %v322
    %v324 = vmul.f32 %v306, 1.442695
    %v325 = vpow.pop %v324
    %v326 = vmul.f32 %v307, 1.442695
    %v327 = vpow.pop %v326
    %v328 = vmul.f32 %v308, 1.442695
    %v329 = vpow.pop %v328
    %v330 = vmul.f32 %v309, 1.442695
    %v331 = vpow.pop %v330
    %v332 = vmul.f32 %v310, 1.442695
    %v333 = vpow.pop %v332
    %v334 = vmul.f32 %v311, 1.442695
    %v335 = vpow.pop %v334
    %v336 = vmul.f32 %v312, 1.442695
    %v337 = vpow.pop %v336
    %v338 = vmul.f32 %v313, 1.442695
    %v339 = vpow.pop %v338
    %v340 = vmul.f32 %v314, 1.442695
    %v341 = vpow.pop %v340
    %v342 = vmul.f32 %v315, 1.442695
    %v343 = vpow.pop %v342
    %v344 = vmul.f32 %v316, 1.442695
    %v345 = vpow.pop %v344
    %v346 = vmul.f32 %v317, 1.442695
    %v347 = vpow.pop %v346
    %v348 = vmul.f32 %v318, 1.442695
    %v349 = vpow.pop %v348
    %v350 = vmul.f32 %v319, 1.442695
    %v351 = vpow.pop %v350
    %368 = vset.pattern.permute.xlu0 0
    %369 = vperm.xlu0 %368, %v321
    %v370 = vpop.permute.xlu0 %369
    %371 = vset.pattern.permute.xlu0 0
    %372 = vperm.xlu0 %371, %v323
    %v373 = vpop.permute.xlu0 %372
    %374 = vset.pattern.permute.xlu0 0
    %375 = vperm.xlu0 %374, %v325
    %v376 = vpop.permute.xlu0 %375
    %377 = vset.pattern.permute.xlu0 0
    %378 = vperm.xlu0 %377, %v327
    %v379 = vpop.permute.xlu0 %378
    %380 = vset.pattern.permute.xlu0 0
    %381 = vperm.xlu0 %380, %v329
    %v382 = vpop.permute.xlu0 %381
    %383 = vset.pattern.permute.xlu0 0
    %384 = vperm.xlu0 %383, %v331
    %v385 = vpop.permute.xlu0 %384
    %386 = vset.pattern.permute.xlu0 0
    %387 = vperm.xlu0 %386, %v333
    %v388 = vpop.permute.xlu0 %387
    %389 = vset.pattern.permute.xlu0 0
    %390 = vperm.xlu0 %389, %v335
    %v391 = vpop.permute.xlu0 %390
    %392 = vset.pattern.permute.xlu0 0
    %393 = vperm.xlu0 %392, %v337
    %v394 = vpop.permute.xlu0 %393
    %395 = vset.pattern.permute.xlu0 0
    %396 = vperm.xlu0 %395, %v339
    %v397 = vpop.permute.xlu0 %396
    %398 = vset.pattern.permute.xlu0 0
    %399 = vperm.xlu0 %398, %v341
    %v400 = vpop.permute.xlu0 %399
    %401 = vset.pattern.permute.xlu0 0
    %402 = vperm.xlu0 %401, %v343
    %v403 = vpop.permute.xlu0 %402
    %404 = vset.pattern.permute.xlu0 0
    %405 = vperm.xlu0 %404, %v345
    %v406 = vpop.permute.xlu0 %405
    %407 = vset.pattern.permute.xlu0 0
    %408 = vperm.xlu0 %407, %v347
    %v409 = vpop.permute.xlu0 %408
    %410 = vset.pattern.permute.xlu0 0
    %411 = vperm.xlu0 %410, %v349
    %v412 = vpop.permute.xlu0 %411
    %413 = vset.pattern.permute.xlu0 0
    %414 = vperm.xlu0 %413, %v351
    %v415 = vpop.permute.xlu0 %414
    %v416 = vlaneseq
    %v417 = vshrl.u32 %v416, 7
    %v418 = vsub.s32 %v169, %v417
    %v419 = vrot.slane %v370, %v418
    %v420 = vlaneseq
    %v421 = vshrl.u32 %v420, 7
    %v422 = vsub.s32 %v174, %v421
    %v423 = vrot.slane %v373, %v422
    %v424 = vsel %vm179, %v423, %v419
    %v425 = vlaneseq
    %v426 = vshrl.u32 %v425, 7
    %v427 = vsub.s32 %v169, %v426
    %v428 = vrot.slane %v376, %v427
    %v429 = vlaneseq
    %v430 = vshrl.u32 %v429, 7
    %v431 = vsub.s32 %v174, %v430
    %v432 = vrot.slane %v379, %v431
    %v433 = vsel %vm179, %v432, %v428
    %v434 = vlaneseq
    %v435 = vshrl.u32 %v434, 7
    %v436 = vsub.s32 %v169, %v435
    %v437 = vrot.slane %v382, %v436
    %v438 = vlaneseq
    %v439 = vshrl.u32 %v438, 7
    %v440 = vsub.s32 %v174, %v439
    %v441 = vrot.slane %v385, %v440
    %v442 = vsel %vm179, %v441, %v437
    %v443 = vlaneseq
    %v444 = vshrl.u32 %v443, 7
    %v445 = vsub.s32 %v169, %v444
    %v446 = vrot.slane %v388, %v445
    %v447 = vlaneseq
    %v448 = vshrl.u32 %v447, 7
    %v449 = vsub.s32 %v174, %v448
    %v450 = vrot.slane %v391, %v449
    %v451 = vsel %vm179, %v450, %v446
    %v452 = vlaneseq
    %v453 = vshrl.u32 %v452, 7
    %v454 = vsub.s32 %v169, %v453
    %v455 = vrot.slane %v394, %v454
    %v456 = vlaneseq
    %v457 = vshrl.u32 %v456, 7
    %v458 = vsub.s32 %v174, %v457
    %v459 = vrot.slane %v397, %v458
    %v460 = vsel %vm179, %v459, %v455
    %v461 = vlaneseq
    %v462 = vshrl.u32 %v461, 7
    %v463 = vsub.s32 %v169, %v462
    %v464 = vrot.slane %v400, %v463
    %v465 = vlaneseq
    %v466 = vshrl.u32 %v465, 7
    %v467 = vsub.s32 %v174, %v466
    %v468 = vrot.slane %v403, %v467
    %v469 = vsel %vm179, %v468, %v464
    %v470 = vlaneseq
    %v471 = vshrl.u32 %v470, 7
    %v472 = vsub.s32 %v169, %v471
    %v473 = vrot.slane %v406, %v472
    %v474 = vlaneseq
    %v475 = vshrl.u32 %v474, 7
    %v476 = vsub.s32 %v174, %v475
    %v477 = vrot.slane %v409, %v476
    %v478 = vsel %vm179, %v477, %v473
    %v479 = vlaneseq
    %v480 = vshrl.u32 %v479, 7
    %v481 = vsub.s32 %v169, %v480
    %v482 = vrot.slane %v412, %v481
    %v483 = vlaneseq
    %v484 = vshrl.u32 %v483, 7
    %v485 = vsub.s32 %v174, %v484
    %v486 = vrot.slane %v415, %v485
    %v487 = vsel %vm179, %v486, %v482
    %v488 = vsel %vm244, %v433, %v424
    %v489 = vsel %vm246, %v442, %v488
    %v490 = vsel %vm248, %v451, %v489
    %v491 = vsel %vm250, %v460, %v490
    %v492 = vsel %vm252, %v469, %v491
    %v493 = vsel %vm254, %v478, %v492
    %v494 = vsel %vm256, %v487, %v493
    %v496 = vsel %vm259, %v494, 0.0
    %497 = vadd.xlane.f32.xlu0 %v496
    %v498 = vpop.xlane.xlu0 %497
    %v515 = vmul.f32 %v30, %v370
    %v516 = vmul.f32 %v31, %v373
    %v517 = vmul.f32 %v32, %v376
    %v518 = vmul.f32 %v33, %v379
    %v519 = vmul.f32 %v34, %v382
    %v520 = vmul.f32 %v35, %v385
    %v521 = vmul.f32 %v36, %v388
    %v522 = vmul.f32 %v37, %v391
    %v523 = vmul.f32 %v38, %v394
    %v524 = vmul.f32 %v39, %v397
    %v525 = vmul.f32 %v40, %v400
    %v526 = vmul.f32 %v41, %v403
    %v527 = vmul.f32 %v42, %v406
    %v528 = vmul.f32 %v43, %v409
    %v529 = vmul.f32 %v44, %v412
    %v530 = vmul.f32 %v45, %v415
    %v531 = vsel %vm70, %v515, 0.0
    %v532 = vsel %vm70, %v516, 0.0
    %v533 = vadd.f32 %v531, %v532
    %v534 = vrot.slane %v533, 4
    %v535 = vadd.f32 %v533, %v534
    %v536 = vrot.slane %v535, 2
    %v537 = vadd.f32 %v535, %v536
    %v538 = vrot.slane %v537, 1
    %v539 = vadd.f32 %v537, %v538
    %v540 = vsel %vm70, %v517, 0.0
    %v541 = vsel %vm70, %v518, 0.0
    %v542 = vadd.f32 %v540, %v541
    %v543 = vrot.slane %v542, 4
    %v544 = vadd.f32 %v542, %v543
    %v545 = vrot.slane %v544, 2
    %v546 = vadd.f32 %v544, %v545
    %v547 = vrot.slane %v546, 1
    %v548 = vadd.f32 %v546, %v547
    %v549 = vsel %vm70, %v519, 0.0
    %v550 = vsel %vm70, %v520, 0.0
    %v551 = vadd.f32 %v549, %v550
    %v552 = vrot.slane %v551, 4
    %v553 = vadd.f32 %v551, %v552
    %v554 = vrot.slane %v553, 2
    %v555 = vadd.f32 %v553, %v554
    %v556 = vrot.slane %v555, 1
    %v557 = vadd.f32 %v555, %v556
    %v558 = vsel %vm70, %v521, 0.0
    %v559 = vsel %vm70, %v522, 0.0
    %v560 = vadd.f32 %v558, %v559
    %v561 = vrot.slane %v560, 4
    %v562 = vadd.f32 %v560, %v561
    %v563 = vrot.slane %v562, 2
    %v564 = vadd.f32 %v562, %v563
    %v565 = vrot.slane %v564, 1
    %v566 = vadd.f32 %v564, %v565
    %v567 = vsel %vm70, %v523, 0.0
    %v568 = vsel %vm70, %v524, 0.0
    %v569 = vadd.f32 %v567, %v568
    %v570 = vrot.slane %v569, 4
    %v571 = vadd.f32 %v569, %v570
    %v572 = vrot.slane %v571, 2
    %v573 = vadd.f32 %v571, %v572
    %v574 = vrot.slane %v573, 1
    %v575 = vadd.f32 %v573, %v574
    %v576 = vsel %vm70, %v525, 0.0
    %v577 = vsel %vm70, %v526, 0.0
    %v578 = vadd.f32 %v576, %v577
    %v579 = vrot.slane %v578, 4
    %v580 = vadd.f32 %v578, %v579
    %v581 = vrot.slane %v580, 2
    %v582 = vadd.f32 %v580, %v581
    %v583 = vrot.slane %v582, 1
    %v584 = vadd.f32 %v582, %v583
    %v585 = vsel %vm70, %v527, 0.0
    %v586 = vsel %vm70, %v528, 0.0
    %v587 = vadd.f32 %v585, %v586
    %v588 = vrot.slane %v587, 4
    %v589 = vadd.f32 %v587, %v588
    %v590 = vrot.slane %v589, 2
    %v591 = vadd.f32 %v589, %v590
    %v592 = vrot.slane %v591, 1
    %v593 = vadd.f32 %v591, %v592
    %v594 = vsel %vm70, %v529, 0.0
    %v595 = vsel %vm70, %v530, 0.0
    %v596 = vadd.f32 %v594, %v595
    %v597 = vrot.slane %v596, 4
    %v598 = vadd.f32 %v596, %v597
    %v599 = vrot.slane %v598, 2
    %v600 = vadd.f32 %v598, %v599
    %v601 = vrot.slane %v600, 1
    %v602 = vadd.f32 %v600, %v601
    %v603 = vrcp.pop %v498
    %v605 = vrot.slane %v603, 1
    %v606 = vrot.slane %v603, 2
    %v607 = vrot.slane %v603, 3
    %v608 = vrot.slane %v603, 4
    %v609 = vrot.slane %v603, 5
    %v610 = vrot.slane %v603, 6
    %v611 = vrot.slane %v603, 7
    %v620 = vmul.f32 %v539, %v603
    %v621 = vmul.f32 %v548, %v605
    %v622 = vmul.f32 %v557, %v606
    %v623 = vmul.f32 %v566, %v607
    %v624 = vmul.f32 %v575, %v608
    %v625 = vmul.f32 %v584, %v609
    %v626 = vmul.f32 %v593, %v610
    %v627 = vmul.f32 %v602, %v611
    %v636 = vrot.slane %v621, 7
    %v637 = vsel %vm244, %v636, %v620
    %v638 = vrot.slane %v622, 6
    %v639 = vsel %vm246, %v638, %v637
    %v640 = vrot.slane %v623, 5
    %v641 = vsel %vm248, %v640, %v639
    %v642 = vrot.slane %v624, 4
    %v643 = vsel %vm250, %v642, %v641
    %v644 = vrot.slane %v625, 3
    %v645 = vsel %vm252, %v644, %v643
    %v646 = vrot.slane %v626, 2
    %v647 = vsel %vm254, %v646, %v645
    %v648 = vrot.slane %v627, 1
    %v649 = vsel %vm256, %v648, %v647
    %651 = vst.msk [vmem:[#allocation6] sm:$0xff] %vm70, %v649
    // Predicated region
    $region18: #{tpu_custom_call.1} parent=1 // pred_check
      _
    $region19: #{tpu_custom_call.1} parent=1 // pred_check_branch
      %653 = sbr.rel (0) target = $region21
    $region20: #{tpu_custom_call.1} parent=1 // pred_region
      %s655 = ssub.s32 128, 128
      %656 = vsyncadd [#allocation5], %s655
      %s658 = sshll.u32 [#allocation6], 4
      %s659 = int_to_ptr.vmem [resolvable:$true] %s658
      %661 = dma.vmem_to_hbm [thread:$0]  %s659, 128, %s3, [#allocation5]
    $region21: #{tpu_custom_call.1} parent=1 // pred_fallthru
      _
    // Predicated region
    $region22: #{tpu_custom_call.1} parent=1 // pred_check
      _
    $region23: #{tpu_custom_call.1} parent=1 // pred_check_branch
      %663 = sbr.rel (0) target = $region25
    $region24: #{tpu_custom_call.1} parent=1 // pred_region
      %664 = dma.done [#allocation5], 128
    $region25: #{tpu_custom_call.1} parent=1 // pred_fallthru
      _
    %665 = vsyncpa [#allocation4], 1
    %666 = vsyncpa [#allocation5], 1

</llo_original>
